<compile_context>
chip_gen: v6e
topology: v6e:2x2x1
jax: 0.10.0
libtpu: 0.0.40
codegen_flags: <defaults>
</compile_context>

<pallas_src>
import jax
import jax.numpy as jnp
from jax.experimental import pallas as pl
from jax.experimental.pallas import tpu as pltpu


def att_kernel(x_ref, wt_ref, o_ref):
    # x_ref : (TB, T, D) batch tile of x
    # wt_ref: (D, O)     pre-transposed W, grid-invariant (resident)
    # o_ref : (TB, D)    lane-dense output tile
    tb, t, d = x_ref.shape

    x3 = x_ref[...]                                  # (TB, T, D), input dtype
    x2 = x3.reshape(tb * t, d)                       # flatten -> one big MXU matmul

    # eij = tanh(x @ W^T): matmul in the input dtype, f32 accumulation.
    eij = jnp.tanh(jnp.dot(x2, wt_ref[...],
                           preferred_element_type=jnp.float32))     # (TB*T, D) f32
    ai = jnp.exp(eij)                                               # (TB*T, D) f32
    inv_ai = pl.reciprocal(ai, approx=False)                        # exact 1/ai

    ai3 = ai.reshape(tb, t, d)
    inv3 = inv_ai.reshape(tb, t, d)

    s = jnp.sum(ai3, axis=1)                                        # (TB, D) f32
    acc = jnp.sum(x3.astype(jnp.float32) * inv3, axis=1)            # (TB, D) f32

    # out = sum_T((s / ai) * x) = s * sum_T(x / ai)   (s is constant over T)
    o_ref[...] = (s * acc).astype(o_ref.dtype)


def _choose_batch_tile(B, T):
    """Pick the batch tile TB so that:
       * TB divides B (no ragged edge),
       * TB % 8 == 0 or TB == B  (keeps the (TB, D) output block sublane-aligned),
       * the grid keeps >= 2 steps when possible (v7x has two TensorCores),
       * TB*T stays <= ~256 rows (one full 256-wide MXU pass on v6e/v7x)."""
    candidates = [tb for tb in range(1, B + 1)
                  if B % tb == 0 and (tb % 8 == 0 or tb == B)]
    multi = [tb for tb in candidates if B // tb >= 2] or candidates
    fit = [tb for tb in multi if tb * T <= 256] or [min(multi)]
    return max(fit)


def att_layer_forward(x, weights, bias=None):
    """Pallas AttLayer forward. bias is unused (matches the PyTorch forward)."""
    B, T, D = x.shape
    O, Din = weights.shape
    assert Din == D and O == D, "need size_out == size_in for the elementwise mul"
    wt = weights.T  # glue: pre-transpose so the kernel does x @ W^T directly

    TB = _choose_batch_tile(B, T)
    grid = (B // TB,)

    itemsize = jnp.dtype(x.dtype).itemsize
    x_blk = TB * T * D * itemsize
    w_blk = D * O * jnp.dtype(wt.dtype).itemsize
    o_blk = TB * D * itemsize
    # double-buffered x/out + resident weight, with generous headroom
    vmem_limit = int(min(64 << 20, max(8 << 20, 4 * (x_blk + w_blk + o_blk))))

    return pl.pallas_call(
        att_kernel,
        out_shape=jax.ShapeDtypeStruct((B, D), x.dtype),
        grid_spec=pltpu.PrefetchScalarGridSpec(
            num_scalar_prefetch=0,
            grid=grid,
            in_specs=[
                pl.BlockSpec((TB, T, D), lambda i: (i, 0, 0)),  # batch tile of x
                pl.BlockSpec((D, O), lambda i: (0, 0)),         # resident weight
            ],
            out_specs=pl.BlockSpec((TB, D), lambda i: (i, 0)),  # lane-dense 2-D
        ),
        compiler_params=pltpu.CompilerParams(
            dimension_semantics=("parallel",),
            vmem_limit_bytes=vmem_limit,
        ),
    )(x, wt)


def att_layer_ref(x, weights):
    # Pure-JAX reference of the same (repaired) semantics.
    eij = jnp.tanh(jnp.einsum("btd,od->bto", x, weights))
    ai = jnp.exp(eij)
    att = jnp.sum(ai, axis=1, keepdims=True) / ai
    return jnp.sum(att * x, axis=1)


if __name__ == "__main__":
    key = jax.random.PRNGKey(0)
    kx, kw = jax.random.split(key)

    B, T = 16, 8
    size_in = size_out = 128  # square (broadcast well-defined) and lane-dense (128)

    x = jax.random.normal(kx, (B, T, size_in), dtype=jnp.float32)
    # nn.init.normal(self.weights) -> standard normal init, deterministic via PRNGKey(0)
    weights = jax.random.normal(kw, (size_out, size_in), dtype=jnp.float32)
    bias = jnp.zeros((size_out,), dtype=jnp.float32)  # declared in __init__, unused in forward

    out = att_layer_forward(x, weights, bias)
    out = jax.block_until_ready(out)

    ref = att_layer_ref(x, weights)
    assert out.shape == (B, size_in)
    assert jnp.allclose(out, ref, atol=1e-3, rtol=1e-3)

    print("KERNEL_OK")
</pallas_src>

<mosaic_0001>
module attributes {stable_mosaic.version = 11 : i64} {
  func.func @att_kernel(%arg0: i32, %arg1: memref<8x8x128xf32, #tpu.memory_space<vmem>>, %arg2: memref<128x128xf32, #tpu.memory_space<vmem>>, %arg3: memref<8x128xf32, #tpu.memory_space<vmem>>) attributes {dimension_semantics = [#tpu.dimension_semantics<parallel>], iteration_bounds = array<i64: 2>, scalar_prefetch = 0 : i64, scratch_operands = 0 : i64, tpu.core_type = #tpu.core_type<tc>, window_params = [{transform_indices = @transform_0, window_bounds = array<i64: 8, 8, 128>}, {pipeline_mode = #tpu.pipeline_mode<synchronous>, transform_indices = @transform_1, window_bounds = array<i64: 128, 128>}, {transform_indices = @transform_2, window_bounds = array<i64: 8, 128>}]} {
    %c0 = arith.constant 0 : index
    %c0_0 = arith.constant 0 : index
    %c0_1 = arith.constant 0 : index
    %0 = vector.load %arg1[%c0, %c0_0, %c0_1] : memref<8x8x128xf32, #tpu.memory_space<vmem>>, vector<8x8x128xf32>
    %1 = vector.shape_cast %0 : vector<8x8x128xf32> to vector<64x128xf32>
    %c0_2 = arith.constant 0 : index
    %c0_3 = arith.constant 0 : index
    %2 = vector.load %arg2[%c0_2, %c0_3] : memref<128x128xf32, #tpu.memory_space<vmem>>, vector<128x128xf32>
    %cst = arith.constant dense<0.000000e+00> : vector<64x128xf32>
    %3 = tpu.matmul %1, %2, %cst {dimension_numbers = #tpu.dot_dimension_numbers<[1], [0], [0], [1], [0, 0, 1, 1], [], []>} : vector<64x128xf32>, vector<128x128xf32>, vector<64x128xf32> -> vector<64x128xf32>
    %4 = math.tanh %3 : vector<64x128xf32>
    %5 = math.exp %4 : vector<64x128xf32>
    %6 = tpu.reciprocal %5 : vector<64x128xf32> -> vector<64x128xf32>
    %7 = vector.shape_cast %5 : vector<64x128xf32> to vector<8x8x128xf32>
    %8 = vector.shape_cast %6 : vector<64x128xf32> to vector<8x8x128xf32>
    %cst_4 = arith.constant dense<0.000000e+00> : vector<8x128xf32>
    %9 = vector.multi_reduction <add>, %7, %cst_4 [1] : vector<8x8x128xf32> to vector<8x128xf32>
    %10 = arith.mulf %0, %8 : vector<8x8x128xf32>
    %cst_5 = arith.constant dense<0.000000e+00> : vector<8x128xf32>
    %11 = vector.multi_reduction <add>, %10, %cst_5 [1] : vector<8x8x128xf32> to vector<8x128xf32>
    %12 = arith.mulf %9, %11 : vector<8x128xf32>
    %c0_6 = arith.constant 0 : index
    %c0_7 = arith.constant 0 : index
    %13 = vector.load %arg3[%c0_6, %c0_7] : memref<8x128xf32, #tpu.memory_space<vmem>>, vector<8x128xf32>
    tpu.vector_store %arg3[%c0_6, %c0_7], %12 {strides = array<i32>} : memref<8x128xf32, #tpu.memory_space<vmem>>, vector<8x128xf32>,
    return
  }
  func.func @transform_0(%arg0: i32) -> (i32, i32, i32) {
    %c0_i32 = arith.constant 0 : i32
    %c0_i32_0 = arith.constant 0 : i32
    %c0_i32_1 = arith.constant 0 : i32
    return %arg0, %c0_i32, %c0_i32_0 : i32, i32, i32
  }
  func.func @transform_1(%arg0: i32) -> (i32, i32) {
    %c0_i32 = arith.constant 0 : i32
    %c0_i32_0 = arith.constant 0 : i32
    %c0_i32_1 = arith.constant 0 : i32
    return %c0_i32, %c0_i32_0 : i32, i32
  }
  func.func @transform_2(%arg0: i32) -> (i32, i32) {
    %c0_i32 = arith.constant 0 : i32
    %c0_i32_0 = arith.constant 0 : i32
    return %arg0, %c0_i32 : i32, i32
  }
}

</mosaic_0001>

<llo_original>
// kernel: tpu_custom_call.1
$region0: #{tpu_custom_call.1}
  #allocation0 [shape = 'u32[]', space=smem, size = 0x4, offset = 0x4, fixed_abs, tag = 'smem constant byte address 0x4 - core index']
  #allocation1 [shape = 'u32[144,128]{1,0:T(1,128)}', space=vmem, size = 0x12000, scoped, tag = 'internal scratch']
  %s0 = inlined_call_operand.hbm [shape: f32[16,8,128], index: 0, kind: input, shape index: {}]
  %s1 = inlined_call_operand.hbm [shape: f32[128,128], index: 1, kind: input, shape index: {}]
  %s2 = inlined_call_operand.hbm [shape: f32[16,128], index: 2, kind: output, shape index: {}]
  %s3 = sld [smem:[#allocation0]]
  $region49: #{tpu_custom_call.1} parent=0
    _
  %s5 = ssub.s32 1, %s3
  %s6 = scalar_select 0, %s5, %s3
  $region1: #{tpu_custom_call.1} parent=0
    #allocation2 [shape = 'u8[65536]{0}', space=vmem, size = 0x10000, scoped, tag = 'input window, operand 0']
    #allocation3 [shape = 's32[2]{0}', space=sflag, size = 0x8, scoped, tag = 'scoped memory for tpu_custom_call.1']
    #allocation4 [shape = 's32[2]{0}', space=sflag, size = 0x8, scoped, tag = 'scoped memory for tpu_custom_call.1']
    #allocation5 [shape = 'u8[65536]{0}', space=vmem, size = 0x10000, scoped, tag = 'input window, operand 1, single buffered']
    #allocation6 [shape = 's32[1]{0}', space=sflag, size = 0x4, scoped, tag = 'scoped memory for tpu_custom_call.1']
    #allocation7 [shape = 'u8[8192]{0}', space=vmem, size = 0x2000, scoped, tag = 'output window, operand 0']
    %7 = vsyncpa [#allocation3], 0
    %s8 = scalar_lea.sflag [#allocation3], 1
    %9 = vsyncpa %s8, 0
    %10 = vsyncpa [#allocation6], 0
    %11 = vsyncpa [#allocation4], 0
    %s12 = scalar_lea.sflag [#allocation4], 1
    %13 = vsyncpa %s12, 0
    loop: start=0, step=1, limit=4
    $region2: #{tpu_custom_call.1} parent=1 // loop_pre_header
      _
    $region3: #{tpu_custom_call.1} parent=1 // loop_header
      %s15 = sphi 0, %s19
      %p16 = scmp.ge.s32.totalorder %s15, 4
      %s25 = sphi 0, %s27
      %s28 = sphi 0, %s25
      %s29 = sphi 0, %s28
      %s45 = sphi 0, %s29
      %s49 = sphi 0, %s49
      %s51 = sphi 0, %s49
      %s52 = sphi 0, %s51
      %s66 = sphi 0, %s52
      %s72 = sphi 0, %s74
      %s75 = sphi 0, %s72
      %s76 = sphi 0, %s75
      %s92 = sphi 0, %s76
    $region4: #{tpu_custom_call.1} parent=1 // loop_header_branch
      %18 = sbr.rel (%p16) target = $region8
    $region5: #{tpu_custom_call.1} parent=1 // loop_body
      %s20 = ssub.s32 %s15, 1
      %s21 = ssub.s32 %s15, 2
      %s22 = sadd.s32 %s15, 1
      %s23 = ssub.s32 %s15, %s22
      %p24 = scmp.eq.s32.totalorder %s23, 0
      %s26 = sadd.s32 %s25, 1
      %s27 = scalar_select %p24, %s25, %s26
      %p30 = pneg %p24
      %p31 = scmp.eq.s32.totalorder %s15, 1
      %p32 = por %p30, %p31
      %p33 = scmp.ne.s32.totalorder %s25, %s28
      %p34 = scmp.eq.s32.totalorder %s15, 0
      %p35 = por %p33, %p34
      %p36 = scmp.ne.s32.totalorder %s25, %s28
      %p37 = scmp.eq.s32.totalorder %s20, 1
      %p38 = por %p36, %p37
      %p39 = scmp.ne.s32.totalorder %s28, %s29
      %p40 = scmp.eq.s32.totalorder %s20, 0
      %p41 = por %p39, %p40
      %p42 = scmp.ne.s32.totalorder %s28, %s29
      %p43 = scmp.eq.s32.totalorder %s21, 1
      %p44 = por %p42, %p43
      %p46 = scmp.ne.s32.totalorder %s29, %s45
      %p47 = scmp.eq.s32.totalorder %s21, 0
      %p48 = por %p46, %p47
      %s50 = sadd.s32 %s49, 1
      %p53 = scmp.eq.s32.totalorder %s15, 1
      %p54 = scmp.ne.s32.totalorder %s49, %s51
      %p55 = scmp.eq.s32.totalorder %s15, 0
      %p56 = por %p54, %p55
      %p57 = scmp.ne.s32.totalorder %s49, %s51
      %p58 = scmp.eq.s32.totalorder %s20, 1
      %p59 = por %p57, %p58
      %p60 = scmp.ne.s32.totalorder %s51, %s52
      %p61 = scmp.eq.s32.totalorder %s20, 0
      %p62 = por %p60, %p61
      %p63 = scmp.ne.s32.totalorder %s51, %s52
      %p64 = scmp.eq.s32.totalorder %s21, 1
      %p65 = por %p63, %p64
      %p67 = scmp.ne.s32.totalorder %s52, %s66
      %p68 = scmp.eq.s32.totalorder %s21, 0
      %p69 = por %p67, %p68
      %s70 = ssub.s32 %s15, %s22
      %p71 = scmp.eq.s32.totalorder %s70, 0
      %s73 = sadd.s32 %s72, 1
      %s74 = scalar_select %p71, %s72, %s73
      %p77 = pneg %p71
      %p78 = scmp.eq.s32.totalorder %s15, 1
      %p79 = por %p77, %p78
      %p80 = scmp.ne.s32.totalorder %s72, %s75
      %p81 = scmp.eq.s32.totalorder %s15, 0
      %p82 = por %p80, %p81
      %p83 = scmp.ne.s32.totalorder %s72, %s75
      %p84 = scmp.eq.s32.totalorder %s20, 1
      %p85 = por %p83, %p84
      %p86 = scmp.ne.s32.totalorder %s75, %s76
      %p87 = scmp.eq.s32.totalorder %s20, 0
      %p88 = por %p86, %p87
      %p89 = scmp.ne.s32.totalorder %s75, %s76
      %p90 = scmp.eq.s32.totalorder %s21, 1
      %p91 = por %p89, %p90
      %p93 = scmp.ne.s32.totalorder %s76, %s92
      %p94 = scmp.eq.s32.totalorder %s21, 0
      %p95 = por %p93, %p94
      %p96 = scmp.le.s32.totalorder 1, %s15
      %p97 = scmp.lt.s32.totalorder %s15, 3
      %p98 = pnand %p96, %p97
      %p99 = pneg %p98
      // Predicated region
      $region9: #{tpu_custom_call.1} parent=5 // pred_check
        _
      $region10: #{tpu_custom_call.1} parent=5 // pred_check_branch
        %101 = sbr.rel (%p98) target = $region12
      $region11: #{tpu_custom_call.1} parent=5 // pred_region
        %s102 = ssub.s32 %s15, 1
        // Predicated region
        $region13: #{tpu_custom_call.1} parent=11 // pred_check
          %p103 = pneg %p62
        $region14: #{tpu_custom_call.1} parent=11 // pred_check_branch
          %105 = sbr.rel (%p103) target = $region16
        $region15: #{tpu_custom_call.1} parent=11 // pred_region
          %s107 = ssub.s32 2048, 2048
          %108 = vsyncadd [#allocation6], %s107
          %s109 = sshll.u32 [#allocation5], 4
          %s110 = int_to_ptr.vmem [resolvable:$true] %s109
          %115 = dma.hbm_to_vmem [thread:$0]  %s1, 2048, %s110, [#allocation6], 128, 128, 8
        $region16: #{tpu_custom_call.1} parent=11 // pred_fallthru
          _
      $region12: #{tpu_custom_call.1} parent=5 // pred_fallthru
        _
      %p116 = scmp.lt.s32.totalorder %s15, 2
      // Predicated region
      $region17: #{tpu_custom_call.1} parent=5 // pred_check
        %p117 = pneg %p116
      $region18: #{tpu_custom_call.1} parent=5 // pred_check_branch
        %119 = sbr.rel (%p117) target = $region20
      $region19: #{tpu_custom_call.1} parent=5 // pred_region
        // Predicated region
        $region21: #{tpu_custom_call.1} parent=19 // pred_check
          %p120 = pneg %p35
        $region22: #{tpu_custom_call.1} parent=19 // pred_check_branch
          %122 = sbr.rel (%p120) target = $region24
        $region23: #{tpu_custom_call.1} parent=19 // pred_region
          %s123 = sand.u32 %s25, 1
          %s124 = scalar_lea.sflag [#allocation3], %s123
          %s125 = sand.u32 %s25, 1
          %s126 = smul.addr %s125, 64
          %s127 = scalar_lea.vmem [#allocation2], %s126
          %s128 = smul.u32 8, %s15
          %s130 = ssub.s32 1024, 1024
          %131 = vsyncadd %s124, %s130
          %s132 = smul.addr %s128, 128
          %s133 = scalar_lea.hbm %s0, %s132
          %s134 = sshll.u32 %s127, 4
          %s135 = int_to_ptr.vmem [resolvable:$true] %s134
          %140 = dma.hbm_to_vmem [thread:$0]  %s133, 1024, %s135, %s124, 128, 128, 8
        $region24: #{tpu_custom_call.1} parent=19 // pred_fallthru
          _
      $region20: #{tpu_custom_call.1} parent=5 // pred_fallthru
        _
      %p141 = scmp.le.s32.totalorder 1, %s15
      %p142 = scmp.lt.s32.totalorder %s15, 3
      %p143 = pnand %p141, %p142
      %p144 = pneg %p143
      // Predicated region
      $region25: #{tpu_custom_call.1} parent=5 // pred_check
        _
      $region26: #{tpu_custom_call.1} parent=5 // pred_check_branch
        %146 = sbr.rel (%p143) target = $region28
      $region27: #{tpu_custom_call.1} parent=5 // pred_region
        %s147 = ssub.s32 %s15, 1
        %s148 = sand.u32 %s28, 1
        %s149 = scalar_lea.sflag [#allocation3], %s148
        %s150 = sand.u32 %s28, 1
        %s151 = smul.addr %s150, 64
        %s152 = scalar_lea.vmem [#allocation2], %s151
        // Predicated region
        $region29: #{tpu_custom_call.1} parent=27 // pred_check
          %p153 = pneg %p41
        $region30: #{tpu_custom_call.1} parent=27 // pred_check_branch
          %155 = sbr.rel (%p153) target = $region32
        $region31: #{tpu_custom_call.1} parent=27 // pred_region
          %156 = dma.done %s149, 1024
        $region32: #{tpu_custom_call.1} parent=27 // pred_fallthru
          _
        // Predicated region
        $region33: #{tpu_custom_call.1} parent=27 // pred_check
          %p157 = pneg %p62
        $region34: #{tpu_custom_call.1} parent=27 // pred_check_branch
          %159 = sbr.rel (%p157) target = $region36
        $region35: #{tpu_custom_call.1} parent=27 // pred_region
          %160 = dma.done [#allocation6], 2048
        $region36: #{tpu_custom_call.1} parent=27 // pred_fallthru
          _
        %s161 = sand.u32 %s28, 1
        %s162 = scalar_lea.sflag [#allocation3], %s161
        %s163 = sand.u32 %s28, 1
        %s164 = smul.addr %s163, 64
        %s165 = scalar_lea.vmem [#allocation2], %s164
        %p166 = pneg %p41
        %p167 = pneg %p38
        %p168 = pneg %p62
        %p169 = pneg %p59
        %p170 = pneg %p88
        %p171 = pneg %p85
        %s172 = sand.u32 %s75, 1
        %s173 = scalar_lea.sflag [#allocation4], %s172
        %s174 = sand.u32 %s75, 1
        %s175 = smul.addr %s174, 8
        %s176 = scalar_lea.vmem [#allocation7], %s175
        %s177 = smul.u32 8, %s20
        %v178 = vld [vmem:[%s152] sm:$0xff]
        %v179 = vld [vmem:[%s152 + $0x8] sm:$0xff]
        %v180 = vld [vmem:[%s152 + $0x10] sm:$0xff]
        %v181 = vld [vmem:[%s152 + $0x18] sm:$0xff]
        %v182 = vld [vmem:[%s152 + $0x20] sm:$0xff]
        %v183 = vld [vmem:[%s152 + $0x28] sm:$0xff]
        %v184 = vld [vmem:[%s152 + $0x30] sm:$0xff]
        %v185 = vld [vmem:[%s152 + $0x38] sm:$0xff]
        %v186 = vld [vmem:[#allocation5] sm:$0xff]
        %v187 = vld [vmem:[#allocation5 + $0x8] sm:$0xff]
        %v188 = vld [vmem:[#allocation5 + $0x10] sm:$0xff]
        %v189 = vld [vmem:[#allocation5 + $0x18] sm:$0xff]
        %v190 = vld [vmem:[#allocation5 + $0x20] sm:$0xff]
        %v191 = vld [vmem:[#allocation5 + $0x28] sm:$0xff]
        %v192 = vld [vmem:[#allocation5 + $0x30] sm:$0xff]
        %v193 = vld [vmem:[#allocation5 + $0x38] sm:$0xff]
        %v194 = vld [vmem:[#allocation5 + $0x40] sm:$0xff]
        %v195 = vld [vmem:[#allocation5 + $0x48] sm:$0xff]
        %v196 = vld [vmem:[#allocation5 + $0x50] sm:$0xff]
        %v197 = vld [vmem:[#allocation5 + $0x58] sm:$0xff]
        %v198 = vld [vmem:[#allocation5 + $0x60] sm:$0xff]
        %v199 = vld [vmem:[#allocation5 + $0x68] sm:$0xff]
        %v200 = vld [vmem:[#allocation5 + $0x70] sm:$0xff]
        %v201 = vld [vmem:[#allocation5 + $0x78] sm:$0xff]
        %202 = vmatprep.subr.mxu0 0.0
        %203 = vmatpush1.msra.mxu0 %v201
        %204 = vmatprep.subr.mxu0 0.0
        %205 = vmatpush1.msra.mxu0 %v200
        %206 = vmatprep.subr.mxu0 0.0
        %207 = vmatpush1.msra.mxu0 %v199
        %208 = vmatprep.subr.mxu0 0.0
        %209 = vmatpush1.msra.mxu0 %v198
        %210 = vmatprep.subr.mxu0 0.0
        %211 = vmatpush1.msra.mxu0 %v197
        %212 = vmatprep.subr.mxu0 0.0
        %213 = vmatpush1.msra.mxu0 %v196
        %214 = vmatprep.subr.mxu0 0.0
        %215 = vmatpush1.msra.mxu0 %v195
        %216 = vmatprep.subr.mxu0 0.0
        %217 = vmatpush1.msra.mxu0 %v194
        %218 = vmatprep.subr.mxu0 0.0
        %219 = vmatpush1.msra.mxu0 %v193
        %220 = vmatprep.subr.mxu0 0.0
        %221 = vmatpush1.msra.mxu0 %v192
        %222 = vmatprep.subr.mxu0 0.0
        %223 = vmatpush1.msra.mxu0 %v191
        %224 = vmatprep.subr.mxu0 0.0
        %225 = vmatpush1.msra.mxu0 %v190
        %226 = vmatprep.subr.mxu0 0.0
        %227 = vmatpush1.msra.mxu0 %v189
        %228 = vmatprep.subr.mxu0 0.0
        %229 = vmatpush1.msra.mxu0 %v188
        %230 = vmatprep.subr.mxu0 0.0
        %231 = vmatpush1.msra.mxu0 %v187
        %232 = vmatprep.subr.mxu0 0.0
        %233 = vmatpush1.msra.mxu0 %v186
        %234 = vmatprep.subr.mxu0 0.0
        %235 = vmatpush2.msra.mxu0 0.0
        %236 = vmatprep.subr.mxu0 0.0
        %237 = vmatpush2.msra.mxu0 0.0
        %238 = vmatprep.subr.mxu0 0.0
        %239 = vmatpush2.msra.mxu0 0.0
        %240 = vmatprep.subr.mxu0 0.0
        %241 = vmatpush2.msra.mxu0 0.0
        %242 = vmatprep.subr.mxu0 0.0
        %243 = vmatpush2.msra.mxu0 0.0
        %244 = vmatprep.subr.mxu0 0.0
        %245 = vmatpush2.msra.mxu0 0.0
        %246 = vmatprep.subr.mxu0 0.0
        %247 = vmatpush2.msra.mxu0 0.0
        %248 = vmatprep.subr.mxu0 0.0
        %249 = vmatpush2.msra.mxu0 0.0
        %250 = vmatprep.subr.mxu0 0.0
        %251 = vmatpush2.msra.mxu0 0.0
        %252 = vmatprep.subr.mxu0 0.0
        %253 = vmatpush2.msra.mxu0 0.0
        %254 = vmatprep.subr.mxu0 0.0
        %255 = vmatpush2.msra.mxu0 0.0
        %256 = vmatprep.subr.mxu0 0.0
        %257 = vmatpush2.msra.mxu0 0.0
        %258 = vmatprep.subr.mxu0 0.0
        %259 = vmatpush2.msra.mxu0 0.0
        %260 = vmatprep.subr.mxu0 0.0
        %261 = vmatpush2.msra.mxu0 0.0
        %262 = vmatprep.subr.mxu0 0.0
        %263 = vmatpush2.msra.mxu0 0.0
        %264 = vmatprep.subr.mxu0 0.0
        %265 = vmatpush2.msra.mxu0 0.0
        %266 = vmatprep.mubr.f32.mxu0 0.0
        %267 = vmatmul.mubr.f32.gmra.mxu0 %v178
        %v268 = vpop.f32.mrf.mxu0
        %v269 = vadd.f32 0.0, %v268
        %v270 = vpop.f32.mrf.mxu0
        %271 = vmatprep.mubr.f32.mxu0 0.0
        %272 = vmatmul.mubr.f32.gmra.mxu0 %v179
        %v273 = vpop.f32.mrf.mxu0
        %v274 = vadd.f32 0.0, %v273
        %v275 = vpop.f32.mrf.mxu0
        %276 = vmatprep.mubr.f32.mxu0 0.0
        %277 = vmatmul.mubr.f32.gmra.mxu0 %v180
        %v278 = vpop.f32.mrf.mxu0
        %v279 = vadd.f32 0.0, %v278
        %v280 = vpop.f32.mrf.mxu0
        %281 = vmatprep.mubr.f32.mxu0 0.0
        %282 = vmatmul.mubr.f32.gmra.mxu0 %v181
        %v283 = vpop.f32.mrf.mxu0
        %v284 = vadd.f32 0.0, %v283
        %v285 = vpop.f32.mrf.mxu0
        %286 = vmatprep.mubr.f32.mxu0 0.0
        %287 = vmatmul.mubr.f32.gmra.mxu0 %v182
        %v288 = vpop.f32.mrf.mxu0
        %v289 = vadd.f32 0.0, %v288
        %v290 = vpop.f32.mrf.mxu0
        %291 = vmatprep.mubr.f32.mxu0 0.0
        %292 = vmatmul.mubr.f32.gmra.mxu0 %v183
        %v293 = vpop.f32.mrf.mxu0
        %v294 = vadd.f32 0.0, %v293
        %v295 = vpop.f32.mrf.mxu0
        %296 = vmatprep.mubr.f32.mxu0 0.0
        %297 = vmatmul.mubr.f32.gmra.mxu0 %v184
        %v298 = vpop.f32.mrf.mxu0
        %v299 = vadd.f32 0.0, %v298
        %v300 = vpop.f32.mrf.mxu0
        %301 = vmatprep.mubr.f32.mxu0 0.0
        %302 = vmatmul.mubr.f32.gmra.mxu0 %v185
        %v303 = vpop.f32.mrf.mxu0
        %v304 = vadd.f32 0.0, %v303
        %v305 = vpop.f32.mrf.mxu0
        %306 = vdwg.mxu0
        %v307 = vtanh.pop %v269
        %v308 = vtanh.pop %v274
        %v309 = vtanh.pop %v279
        %v310 = vtanh.pop %v284
        %v311 = vtanh.pop %v289
        %v312 = vtanh.pop %v294
        %v313 = vtanh.pop %v299
        %v314 = vtanh.pop %v304
        %v315 = vmul.f32 %v307, 1.442695
        %v316 = vpow.pop %v315
        %v317 = vmul.f32 %v308, 1.442695
        %v318 = vpow.pop %v317
        %v319 = vmul.f32 %v309, 1.442695
        %v320 = vpow.pop %v319
        %v321 = vmul.f32 %v310, 1.442695
        %v322 = vpow.pop %v321
        %v323 = vmul.f32 %v311, 1.442695
        %v324 = vpow.pop %v323
        %v325 = vmul.f32 %v312, 1.442695
        %v326 = vpow.pop %v325
        %v327 = vmul.f32 %v313, 1.442695
        %v328 = vpow.pop %v327
        %v329 = vmul.f32 %v314, 1.442695
        %v330 = vpow.pop %v329
        %v331 = vrcp.pop %v316
        %v332 = vrcp.pop %v318
        %v333 = vrcp.pop %v320
        %v334 = vrcp.pop %v322
        %v335 = vrcp.pop %v324
        %v336 = vrcp.pop %v326
        %v337 = vrcp.pop %v328
        %v338 = vrcp.pop %v330
        %v339 = vrot.slane %v316, 4
        %v340 = vadd.f32 %v316, %v339
        %v341 = vrot.slane %v340, 2
        %v342 = vadd.f32 %v340, %v341
        %v343 = vrot.slane %v342, 1
        %v344 = vadd.f32 %v342, %v343
        %v345 = vrot.slane %v318, 4
        %v346 = vadd.f32 %v318, %v345
        %v347 = vrot.slane %v346, 2
        %v348 = vadd.f32 %v346, %v347
        %v349 = vrot.slane %v348, 1
        %v350 = vadd.f32 %v348, %v349
        %v351 = vrot.slane %v320, 4
        %v352 = vadd.f32 %v320, %v351
        %v353 = vrot.slane %v352, 2
        %v354 = vadd.f32 %v352, %v353
        %v355 = vrot.slane %v354, 1
        %v356 = vadd.f32 %v354, %v355
        %v357 = vrot.slane %v322, 4
        %v358 = vadd.f32 %v322, %v357
        %v359 = vrot.slane %v358, 2
        %v360 = vadd.f32 %v358, %v359
        %v361 = vrot.slane %v360, 1
        %v362 = vadd.f32 %v360, %v361
        %v363 = vrot.slane %v324, 4
        %v364 = vadd.f32 %v324, %v363
        %v365 = vrot.slane %v364, 2
        %v366 = vadd.f32 %v364, %v365
        %v367 = vrot.slane %v366, 1
        %v368 = vadd.f32 %v366, %v367
        %v369 = vrot.slane %v326, 4
        %v370 = vadd.f32 %v326, %v369
        %v371 = vrot.slane %v370, 2
        %v372 = vadd.f32 %v370, %v371
        %v373 = vrot.slane %v372, 1
        %v374 = vadd.f32 %v372, %v373
        %v375 = vrot.slane %v328, 4
        %v376 = vadd.f32 %v328, %v375
        %v377 = vrot.slane %v376, 2
        %v378 = vadd.f32 %v376, %v377
        %v379 = vrot.slane %v378, 1
        %v380 = vadd.f32 %v378, %v379
        %v381 = vrot.slane %v330, 4
        %v382 = vadd.f32 %v330, %v381
        %v383 = vrot.slane %v382, 2
        %v384 = vadd.f32 %v382, %v383
        %v385 = vrot.slane %v384, 1
        %v386 = vadd.f32 %v384, %v385
        %v387 = vmul.f32 %v178, %v331
        %v388 = vmul.f32 %v179, %v332
        %v389 = vmul.f32 %v180, %v333
        %v390 = vmul.f32 %v181, %v334
        %v391 = vmul.f32 %v182, %v335
        %v392 = vmul.f32 %v183, %v336
        %v393 = vmul.f32 %v184, %v337
        %v394 = vmul.f32 %v185, %v338
        %v395 = vrot.slane %v387, 4
        %v396 = vadd.f32 %v387, %v395
        %v397 = vrot.slane %v396, 2
        %v398 = vadd.f32 %v396, %v397
        %v399 = vrot.slane %v398, 1
        %v400 = vadd.f32 %v398, %v399
        %v401 = vrot.slane %v388, 4
        %v402 = vadd.f32 %v388, %v401
        %v403 = vrot.slane %v402, 2
        %v404 = vadd.f32 %v402, %v403
        %v405 = vrot.slane %v404, 1
        %v406 = vadd.f32 %v404, %v405
        %v407 = vrot.slane %v389, 4
        %v408 = vadd.f32 %v389, %v407
        %v409 = vrot.slane %v408, 2
        %v410 = vadd.f32 %v408, %v409
        %v411 = vrot.slane %v410, 1
        %v412 = vadd.f32 %v410, %v411
        %v413 = vrot.slane %v390, 4
        %v414 = vadd.f32 %v390, %v413
        %v415 = vrot.slane %v414, 2
        %v416 = vadd.f32 %v414, %v415
        %v417 = vrot.slane %v416, 1
        %v418 = vadd.f32 %v416, %v417
        %v419 = vrot.slane %v391, 4
        %v420 = vadd.f32 %v391, %v419
        %v421 = vrot.slane %v420, 2
        %v422 = vadd.f32 %v420, %v421
        %v423 = vrot.slane %v422, 1
        %v424 = vadd.f32 %v422, %v423
        %v425 = vrot.slane %v392, 4
        %v426 = vadd.f32 %v392, %v425
        %v427 = vrot.slane %v426, 2
        %v428 = vadd.f32 %v426, %v427
        %v429 = vrot.slane %v428, 1
        %v430 = vadd.f32 %v428, %v429
        %v431 = vrot.slane %v393, 4
        %v432 = vadd.f32 %v393, %v431
        %v433 = vrot.slane %v432, 2
        %v434 = vadd.f32 %v432, %v433
        %v435 = vrot.slane %v434, 1
        %v436 = vadd.f32 %v434, %v435
        %v437 = vrot.slane %v394, 4
        %v438 = vadd.f32 %v394, %v437
        %v439 = vrot.slane %v438, 2
        %v440 = vadd.f32 %v438, %v439
        %v441 = vrot.slane %v440, 1
        %v442 = vadd.f32 %v440, %v441
        %v443 = vmul.f32 %v344, %v400
        %v444 = vmul.f32 %v350, %v406
        %v445 = vmul.f32 %v356, %v412
        %v446 = vmul.f32 %v362, %v418
        %v447 = vmul.f32 %v368, %v424
        %v448 = vmul.f32 %v374, %v430
        %v449 = vmul.f32 %v380, %v436
        %v450 = vmul.f32 %v386, %v442
        %vm459 = vcmask 1041409
        %v460 = vsel %vm459, %v444, %v443
        %vm461 = vcmask 1042434
        %v462 = vsel %vm461, %v445, %v460
        %vm463 = vcmask 1043459
        %v464 = vsel %vm463, %v446, %v462
        %vm465 = vcmask 1044484
        %v466 = vsel %vm465, %v447, %v464
        %vm467 = vcmask 1045509
        %v468 = vsel %vm467, %v448, %v466
        %vm469 = vcmask 1046534
        %v470 = vsel %vm469, %v449, %v468
        %vm471 = vcmask 1047559
        %v472 = vsel %vm471, %v450, %v470
        %474 = vst [vmem:[%s176] sm:$0xff] %v472
        %s475 = sand.u32 %s75, 1
        %s476 = scalar_lea.sflag [#allocation4], %s475
        %s477 = sand.u32 %s75, 1
        %s478 = smul.addr %s477, 8
        %s479 = scalar_lea.vmem [#allocation7], %s478
        // Predicated region
        $region37: #{tpu_custom_call.1} parent=27 // pred_check
          %p480 = pneg %p85
        $region38: #{tpu_custom_call.1} parent=27 // pred_check_branch
          %482 = sbr.rel (%p480) target = $region40
        $region39: #{tpu_custom_call.1} parent=27 // pred_region
          %s484 = ssub.s32 128, 128
          %485 = vsyncadd %s476, %s484
          %s486 = smul.addr %s20, 128
          %s487 = scalar_lea.hbm %s2, %s486
          %s489 = sshll.u32 %s479, 4
          %s490 = int_to_ptr.vmem [resolvable:$true] %s489
          %492 = dma.vmem_to_hbm [thread:$0]  %s490, 128, %s487, %s476
        $region40: #{tpu_custom_call.1} parent=27 // pred_fallthru
          _
      $region28: #{tpu_custom_call.1} parent=5 // pred_fallthru
        _
      %p493 = scmp.le.s32.totalorder 2, %s15
      // Predicated region
      $region41: #{tpu_custom_call.1} parent=5 // pred_check
        %p494 = pneg %p493
      $region42: #{tpu_custom_call.1} parent=5 // pred_check_branch
        %496 = sbr.rel (%p494) target = $region44
      $region43: #{tpu_custom_call.1} parent=5 // pred_region
        %s497 = ssub.s32 %s15, 2
        // Predicated region
        $region45: #{tpu_custom_call.1} parent=43 // pred_check
          %p498 = pneg %p91
        $region46: #{tpu_custom_call.1} parent=43 // pred_check_branch
          %500 = sbr.rel (%p498) target = $region48
        $region47: #{tpu_custom_call.1} parent=43 // pred_region
          %s501 = sand.u32 %s76, 1
          %s502 = scalar_lea.sflag [#allocation4], %s501
          %s503 = sand.u32 %s76, 1
          %s504 = smul.addr %s503, 8
          %s505 = scalar_lea.vmem [#allocation7], %s504
          %506 = dma.done %s502, 128
        $region48: #{tpu_custom_call.1} parent=43 // pred_fallthru
          _
      $region44: #{tpu_custom_call.1} parent=5 // pred_fallthru
        _
    $region6: #{tpu_custom_call.1} parent=1 // loop_footer
      %s19 = sadd.s32 1, %s15
    $region7: #{tpu_custom_call.1} parent=1 // loop_footer_branch
      %14 = sbr.rel target = $region3
    $region8: #{tpu_custom_call.1} parent=1 // loop_exit
      _
    %507 = vsyncpa [#allocation3], 1
    %s508 = scalar_lea.sflag [#allocation3], 1
    %509 = vsyncpa %s508, 1
    %510 = vsyncpa [#allocation6], 1
    %511 = vsyncpa [#allocation4], 1
    %s512 = scalar_lea.sflag [#allocation4], 1
    %513 = vsyncpa %s512, 1

</llo_original>
